<compile_context>
chip_gen: v7x
topology: tpu7x:2x2x1
jax: 0.10.0
libtpu: 0.0.40
codegen_flags: <defaults>
</compile_context>

<pallas_src>
import functools

import jax
import jax.numpy as jnp
from jax import lax
from jax.experimental import pallas as pl
from jax.experimental.pallas import tpu as pltpu


def _round_up(v, m):
    return ((v + m - 1) // m) * m


def fp_kernel(x_ref, pos_t_ref, pos_sqn_ref, batch_ref,
              pos_skip_ref, batch_skip_ref, x_skip_ref,
              w1a_ref, w1b_ref, b1_ref, w2_ref, b2_ref,
              out_ref, *, k):
    TM = pos_skip_ref.shape[0]          # rows of this fine-point tile
    NP = x_ref.shape[0]                 # padded number of coarse points
    BIG = jnp.float32(1e30)

    # ---- squared distance matrix on the MXU: ||q||^2 + ||p||^2 - 2 q.p^T ----
    q = pos_skip_ref[...]                                                   # [TM, 3]
    q_sq = jnp.sum(q * q, axis=1, keepdims=True)                            # [TM, 1]
    cross = jnp.dot(q, pos_t_ref[...], preferred_element_type=jnp.float32)  # [TM, NP]
    D = jnp.maximum(q_sq + pos_sqn_ref[...] - 2.0 * cross, 0.0)             # clamp cancellation

    # ---- mask cross-batch pairs (padded source columns carry batch = -1) ----
    same = batch_skip_ref[...] == batch_ref[...]                            # [TM,1]==[1,NP]
    D = jnp.where(same, D, BIG)

    # ---- iterative k-nearest selection, accumulated as a sparse weight matrix ----
    iota = lax.broadcasted_iota(jnp.int32, (TM, NP), 1)
    W = jnp.zeros((TM, NP), jnp.float32)
    for _ in range(k):  # k is small and static
        dmin = jnp.min(D, axis=1, keepdims=True)                                  # [TM,1]
        idx = jnp.min(jnp.where(D == dmin, iota, NP), axis=1, keepdims=True)      # first argmin
        sel = iota == idx                                                         # reused predicate
        w = 1.0 / jnp.maximum(dmin, 1e-16)                                        # 1/clamp(d^2)
        W = W + jnp.where(sel, w, 0.0)
        D = jnp.where(sel, BIG, D)                                                # exclude selected

    # ---- inverse-distance-weighted interpolation: y = (W @ x) / sum(W) ----
    y = jnp.dot(W, x_ref[...], preferred_element_type=jnp.float32)               # [TM, C]
    y = y / jnp.sum(W, axis=1, keepdims=True)

    # ---- MLP on concat([y, x_skip]) with concat folded into the first Linear ----
    h = (jnp.dot(y, w1a_ref[...], preferred_element_type=jnp.float32)
         + jnp.dot(x_skip_ref[...], w1b_ref[...], preferred_element_type=jnp.float32)
         + b1_ref[...])
    h = jnp.maximum(h, 0.0)
    out = jnp.dot(h, w2_ref[...], preferred_element_type=jnp.float32) + b2_ref[...]
    out_ref[...] = out.astype(out_ref.dtype)


def feature_propagation(x, pos, batch, x_skip, pos_skip, batch_skip, *, k, params):
    """Returns (nn(concat(knn_interpolate(x, pos -> pos_skip), x_skip)), pos_skip, batch_skip)."""
    w1a, w1b, b1, w2, b2 = params
    N, C = x.shape
    M = pos_skip.shape[0]
    C_skip = x_skip.shape[1]
    C_out = w2.shape[1]
    f32 = jnp.float32

    # ---- VMEM-aware tile selection (v7x: 64 MiB, v5e/v6e: 128 MiB) ----
    try:
        vmem_cap = int(pltpu.get_tpu_info().vmem_capacity_bytes)
    except Exception:
        vmem_cap = 64 * 1024 * 1024  # conservative fallback

    N_pad = _round_up(max(N, 1), 128)                      # lane-dense source axis
    budget = vmem_cap // 4                                 # leave room for double-buffering
    tile_m = (budget // (6 * N_pad * 4)) // 8 * 8          # ~6 live [TILE_M, N_pad] f32 temps
    tile_m = max(8, min(512, tile_m))
    tile_m = min(tile_m, _round_up(M, 8))
    M_pad = _round_up(M, tile_m)
    grid = (M_pad // tile_m,)

    def pad_rows(a, rows, fill=0.0):
        extra = rows - a.shape[0]
        if extra == 0:
            return a
        return jnp.concatenate(
            [a, jnp.full((extra,) + a.shape[1:], fill, a.dtype)], axis=0)

    x_p = pad_rows(x.astype(f32), N_pad)
    pos_p = pad_rows(pos.astype(f32), N_pad)
    batch_p = pad_rows(batch.astype(jnp.int32), N_pad, fill=-1)       # padded src -> no batch
    pos_skip_p = pad_rows(pos_skip.astype(f32), M_pad)
    batch_skip_p = pad_rows(batch_skip.astype(jnp.int32), M_pad, fill=-1)
    x_skip_p = pad_rows(x_skip.astype(f32), M_pad)

    pos_t = jnp.transpose(pos_p)                                      # [3, N_pad]
    pos_sqn = jnp.sum(pos_p * pos_p, axis=1).reshape(1, N_pad)        # [1, N_pad]
    batch_row = batch_p.reshape(1, N_pad)
    batch_skip_col = batch_skip_p.reshape(M_pad, 1)

    def const(shape):          # grid-invariant operand: stays VMEM-resident
        return pl.BlockSpec(shape, lambda i, _s=shape: (0,) * len(_s))

    def tiled(shape):          # one TILE_M-row block per grid step
        return pl.BlockSpec(shape, lambda i: (i, 0))

    in_specs = [
        const((N_pad, C)),          # x
        const((3, N_pad)),          # pos^T
        const((1, N_pad)),          # ||pos||^2
        const((1, N_pad)),          # batch
        tiled((tile_m, 3)),         # pos_skip
        tiled((tile_m, 1)),         # batch_skip
        tiled((tile_m, C_skip)),    # x_skip
        const(w1a.shape),
        const(w1b.shape),
        const(b1.shape),
        const(w2.shape),
        const(b2.shape),
    ]
    out_specs = tiled((tile_m, C_out))

    vmem_limit = int(min(vmem_cap * 0.8, 100 * 1024 * 1024))

    out = pl.pallas_call(
        functools.partial(fp_kernel, k=k),
        out_shape=jax.ShapeDtypeStruct((M_pad, C_out), f32),
        grid=grid,
        in_specs=in_specs,
        out_specs=out_specs,
        compiler_params=pltpu.CompilerParams(
            dimension_semantics=("parallel",),
            vmem_limit_bytes=vmem_limit,
        ),
    )(
        x_p, pos_t, pos_sqn, batch_row,
        pos_skip_p, batch_skip_col, x_skip_p,
        w1a.astype(f32), w1b.astype(f32), b1.astype(f32),
        w2.astype(f32), b2.astype(f32),
    )
    return out[:M], pos_skip, batch_skip


def reference_forward(x, pos, batch, x_skip, pos_skip, batch_skip, *, k, params):
    """Independent pure-JAX reference (top_k + gather) for correctness checking."""
    w1a, w1b, b1, w2, b2 = params
    d2 = jnp.sum((pos_skip[:, None, :] - pos[None, :, :]) ** 2, axis=-1)   # [M,N]
    same = batch_skip[:, None] == batch[None, :]
    d2m = jnp.where(same, d2, jnp.inf)
    neg_vals, idxs = lax.top_k(-d2m, k)                                    # k smallest
    dk = -neg_vals                                                         # [M,k]
    w = 1.0 / jnp.maximum(dk, 1e-16)
    feats = x[idxs]                                                        # [M,k,C]
    y = jnp.sum(feats * w[..., None], axis=1) / jnp.sum(w, axis=1, keepdims=True)
    z = jnp.concatenate([y, x_skip], axis=1)
    w1 = jnp.concatenate([w1a, w1b], axis=0)
    h = jax.nn.relu(z @ w1 + b1)
    return h @ w2 + b2


if __name__ == "__main__":
    key = jax.random.PRNGKey(0)
    ks = jax.random.split(key, 10)

    # Small shapes: 2 batches, 8 coarse pts/batch, 16 fine pts/batch.
    N_SRC, N_DST = 16, 32
    C_X, C_SKIP, HID, C_OUT = 16, 16, 32, 16
    K = 3

    x = jax.random.normal(ks[0], (N_SRC, C_X), jnp.float32)
    pos = jax.random.normal(ks[1], (N_SRC, 3), jnp.float32)
    batch = jnp.concatenate([jnp.zeros(8, jnp.int32), jnp.ones(8, jnp.int32)])
    x_skip = jax.random.normal(ks[2], (N_DST, C_SKIP), jnp.float32)
    pos_skip = jax.random.normal(ks[3], (N_DST, 3), jnp.float32)
    batch_skip = jnp.concatenate([jnp.zeros(16, jnp.int32), jnp.ones(16, jnp.int32)])

    # Deterministic MLP params (self.nn = Linear(C_X+C_SKIP, HID) -> ReLU -> Linear(HID, C_OUT)).
    # First Linear weight split into the interpolated-feature part (w1a) and skip part (w1b).
    w1a = 0.1 * jax.random.normal(ks[4], (C_X, HID), jnp.float32)
    w1b = 0.1 * jax.random.normal(ks[5], (C_SKIP, HID), jnp.float32)
    b1 = 0.01 * jax.random.normal(ks[6], (1, HID), jnp.float32)
    w2 = 0.1 * jax.random.normal(ks[7], (HID, C_OUT), jnp.float32)
    b2 = 0.01 * jax.random.normal(ks[8], (1, C_OUT), jnp.float32)
    params = (w1a, w1b, b1, w2, b2)

    out, pos_out, batch_out = feature_propagation(
        x, pos, batch, x_skip, pos_skip, batch_skip, k=K, params=params)
    jax.block_until_ready(out)

    ref = reference_forward(x, pos, batch, x_skip, pos_skip, batch_skip, k=K, params=params)
    assert out.shape == (N_DST, C_OUT)
    # Slightly relaxed tolerance: the MXU form ||a||^2+||b||^2-2ab of the distance matrix
    # differs from the reference's direct diff by f32-cancellation-level noise in 1/d^2.
    assert jnp.allclose(out, ref, atol=1e-3, rtol=1e-3), \
        f"mismatch: max abs err {jnp.max(jnp.abs(out - ref))}"
    assert pos_out.shape == pos_skip.shape and batch_out.shape == batch_skip.shape

    print("KERNEL_OK")
</pallas_src>

<mosaic_0001>
module attributes {stable_mosaic.version = 11 : i64} {
  func.func @fp_kernel(%arg0: i32, %arg1: memref<128x16xf32, #tpu.memory_space<vmem>>, %arg2: memref<3x128xf32, #tpu.memory_space<vmem>>, %arg3: memref<1x128xf32, #tpu.memory_space<vmem>>, %arg4: memref<1x128xi32, #tpu.memory_space<vmem>>, %arg5: memref<32x3xf32, #tpu.memory_space<vmem>>, %arg6: memref<32x1xi32, #tpu.memory_space<vmem>>, %arg7: memref<32x16xf32, #tpu.memory_space<vmem>>, %arg8: memref<16x32xf32, #tpu.memory_space<vmem>>, %arg9: memref<16x32xf32, #tpu.memory_space<vmem>>, %arg10: memref<1x32xf32, #tpu.memory_space<vmem>>, %arg11: memref<32x16xf32, #tpu.memory_space<vmem>>, %arg12: memref<1x16xf32, #tpu.memory_space<vmem>>, %arg13: memref<32x16xf32, #tpu.memory_space<vmem>>) attributes {dimension_semantics = [#tpu.dimension_semantics<parallel>], iteration_bounds = array<i64: 1>, scalar_prefetch = 0 : i64, scratch_operands = 0 : i64, tpu.core_type = #tpu.core_type<tc>, window_params = [{pipeline_mode = #tpu.pipeline_mode<synchronous>, transform_indices = @transform_0, window_bounds = array<i64: 128, 16>}, {pipeline_mode = #tpu.pipeline_mode<synchronous>, transform_indices = @transform_1, window_bounds = array<i64: 3, 128>}, {pipeline_mode = #tpu.pipeline_mode<synchronous>, transform_indices = @transform_2, window_bounds = array<i64: 1, 128>}, {pipeline_mode = #tpu.pipeline_mode<synchronous>, transform_indices = @transform_3, window_bounds = array<i64: 1, 128>}, {transform_indices = @transform_4, window_bounds = array<i64: 32, 3>}, {transform_indices = @transform_5, window_bounds = array<i64: 32, 1>}, {transform_indices = @transform_6, window_bounds = array<i64: 32, 16>}, {pipeline_mode = #tpu.pipeline_mode<synchronous>, transform_indices = @transform_7, window_bounds = array<i64: 16, 32>}, {pipeline_mode = #tpu.pipeline_mode<synchronous>, transform_indices = @transform_8, window_bounds = array<i64: 16, 32>}, {pipeline_mode = #tpu.pipeline_mode<synchronous>, transform_indices = @transform_9, window_bounds = array<i64: 1, 32>}, {pipeline_mode = #tpu.pipeline_mode<synchronous>, transform_indices = @transform_10, window_bounds = array<i64: 32, 16>}, {pipeline_mode = #tpu.pipeline_mode<synchronous>, transform_indices = @transform_11, window_bounds = array<i64: 1, 16>}, {transform_indices = @transform_12, window_bounds = array<i64: 32, 16>}]} {
    %c0 = arith.constant 0 : index
    %c0_0 = arith.constant 0 : index
    %0 = vector.load %arg5[%c0, %c0_0] : memref<32x3xf32, #tpu.memory_space<vmem>>, vector<32x3xf32>
    %1 = arith.mulf %0, %0 : vector<32x3xf32>
    %cst = arith.constant dense<0.000000e+00> : vector<32xf32>
    %2 = vector.multi_reduction <add>, %1, %cst [1] : vector<32x3xf32> to vector<32xf32>
    %3 = vector.shape_cast %2 : vector<32xf32> to vector<32x1xf32>
    %c0_1 = arith.constant 0 : index
    %c0_2 = arith.constant 0 : index
    %4 = vector.load %arg2[%c0_1, %c0_2] : memref<3x128xf32, #tpu.memory_space<vmem>>, vector<3x128xf32>
    %cst_3 = arith.constant dense<0.000000e+00> : vector<32x128xf32>
    %5 = tpu.matmul %0, %4, %cst_3 {dimension_numbers = #tpu.dot_dimension_numbers<[1], [0], [0], [1], [0, 0, 1, 1], [], []>} : vector<32x3xf32>, vector<3x128xf32>, vector<32x128xf32> -> vector<32x128xf32>
    %c0_4 = arith.constant 0 : index
    %c0_5 = arith.constant 0 : index
    %6 = vector.load %arg3[%c0_4, %c0_5] : memref<1x128xf32, #tpu.memory_space<vmem>>, vector<1x128xf32>
    %7 = vector.broadcast %3 : vector<32x1xf32> to vector<32x128xf32>
    %8 = vector.broadcast %6 : vector<1x128xf32> to vector<32x128xf32>
    %9 = arith.addf %7, %8 : vector<32x128xf32>
    %cst_6 = arith.constant 2.000000e+00 : f32
    %10 = vector.broadcast %cst_6 : f32 to vector<32x128xf32>
    %11 = arith.mulf %10, %5 : vector<32x128xf32>
    %12 = arith.subf %9, %11 : vector<32x128xf32>
    %cst_7 = arith.constant 0.000000e+00 : f32
    %13 = vector.broadcast %cst_7 : f32 to vector<32x128xf32>
    %14 = arith.maximumf %12, %13 : vector<32x128xf32>
    %c0_8 = arith.constant 0 : index
    %c0_9 = arith.constant 0 : index
    %15 = vector.load %arg6[%c0_8, %c0_9] : memref<32x1xi32, #tpu.memory_space<vmem>>, vector<32x1xi32>
    %c0_10 = arith.constant 0 : index
    %c0_11 = arith.constant 0 : index
    %16 = vector.load %arg4[%c0_10, %c0_11] : memref<1x128xi32, #tpu.memory_space<vmem>>, vector<1x128xi32>
    %17 = vector.broadcast %15 : vector<32x1xi32> to vector<32x128xi32>
    %18 = vector.broadcast %16 : vector<1x128xi32> to vector<32x128xi32>
    %19 = arith.cmpi eq, %17, %18 : vector<32x128xi32>
    %cst_12 = arith.constant 1.000000e+30 : f32
    %20 = vector.broadcast %cst_12 : f32 to vector<32x128xf32>
    %21 = arith.select %19, %14, %20 : vector<32x128xi1>, vector<32x128xf32>
    %22 = tpu.iota {dimensions = array<i32: 1>} : vector<32x128xi32>
    %cst_13 = arith.constant 0.000000e+00 : f32
    %23 = vector.broadcast %cst_13 : f32 to vector<32x128xf32>
    %cst_14 = arith.constant dense<0x7F800000> : vector<32xf32>
    %24 = vector.multi_reduction <minimumf>, %21, %cst_14 [1] : vector<32x128xf32> to vector<32xf32>
    %25 = vector.shape_cast %24 : vector<32xf32> to vector<32x1xf32>
    %26 = vector.broadcast %25 : vector<32x1xf32> to vector<32x128xf32>
    %27 = arith.cmpf oeq, %21, %26 : vector<32x128xf32>
    %c128_i32 = arith.constant 128 : i32
    %28 = vector.broadcast %c128_i32 : i32 to vector<32x128xi32>
    %29 = arith.select %27, %22, %28 : vector<32x128xi1>, vector<32x128xi32>
    %cst_15 = arith.constant dense<2147483647> : vector<32xi32>
    %30 = vector.multi_reduction <minsi>, %29, %cst_15 [1] : vector<32x128xi32> to vector<32xi32>
    %31 = vector.shape_cast %30 : vector<32xi32> to vector<32x1xi32>
    %32 = vector.broadcast %31 : vector<32x1xi32> to vector<32x128xi32>
    %33 = arith.cmpi eq, %22, %32 : vector<32x128xi32>
    %cst_16 = arith.constant 1.000000e-16 : f32
    %34 = vector.broadcast %cst_16 : f32 to vector<32x1xf32>
    %35 = arith.maximumf %25, %34 : vector<32x1xf32>
    %cst_17 = arith.constant 1.000000e+00 : f32
    %36 = vector.broadcast %cst_17 : f32 to vector<32x1xf32>
    %37 = arith.divf %36, %35 : vector<32x1xf32>
    %cst_18 = arith.constant 0.000000e+00 : f32
    %38 = vector.shape_cast %37 : vector<32x1xf32> to vector<32x1xf32>
    %39 = vector.broadcast %38 : vector<32x1xf32> to vector<32x128xf32>
    %40 = vector.broadcast %cst_18 : f32 to vector<32x128xf32>
    %41 = arith.select %33, %39, %40 : vector<32x128xi1>, vector<32x128xf32>
    %42 = arith.addf %23, %41 : vector<32x128xf32>
    %cst_19 = arith.constant 1.000000e+30 : f32
    %43 = vector.broadcast %cst_19 : f32 to vector<32x128xf32>
    %44 = arith.select %33, %43, %21 : vector<32x128xi1>, vector<32x128xf32>
    %cst_20 = arith.constant dense<0x7F800000> : vector<32xf32>
    %45 = vector.multi_reduction <minimumf>, %44, %cst_20 [1] : vector<32x128xf32> to vector<32xf32>
    %46 = vector.shape_cast %45 : vector<32xf32> to vector<32x1xf32>
    %47 = vector.broadcast %46 : vector<32x1xf32> to vector<32x128xf32>
    %48 = arith.cmpf oeq, %44, %47 : vector<32x128xf32>
    %c128_i32_21 = arith.constant 128 : i32
    %49 = vector.broadcast %c128_i32_21 : i32 to vector<32x128xi32>
    %50 = arith.select %48, %22, %49 : vector<32x128xi1>, vector<32x128xi32>
    %cst_22 = arith.constant dense<2147483647> : vector<32xi32>
    %51 = vector.multi_reduction <minsi>, %50, %cst_22 [1] : vector<32x128xi32> to vector<32xi32>
    %52 = vector.shape_cast %51 : vector<32xi32> to vector<32x1xi32>
    %53 = vector.broadcast %52 : vector<32x1xi32> to vector<32x128xi32>
    %54 = arith.cmpi eq, %22, %53 : vector<32x128xi32>
    %cst_23 = arith.constant 1.000000e-16 : f32
    %55 = vector.broadcast %cst_23 : f32 to vector<32x1xf32>
    %56 = arith.maximumf %46, %55 : vector<32x1xf32>
    %cst_24 = arith.constant 1.000000e+00 : f32
    %57 = vector.broadcast %cst_24 : f32 to vector<32x1xf32>
    %58 = arith.divf %57, %56 : vector<32x1xf32>
    %cst_25 = arith.constant 0.000000e+00 : f32
    %59 = vector.shape_cast %58 : vector<32x1xf32> to vector<32x1xf32>
    %60 = vector.broadcast %59 : vector<32x1xf32> to vector<32x128xf32>
    %61 = vector.broadcast %cst_25 : f32 to vector<32x128xf32>
    %62 = arith.select %54, %60, %61 : vector<32x128xi1>, vector<32x128xf32>
    %63 = arith.addf %42, %62 : vector<32x128xf32>
    %cst_26 = arith.constant 1.000000e+30 : f32
    %64 = vector.broadcast %cst_26 : f32 to vector<32x128xf32>
    %65 = arith.select %54, %64, %44 : vector<32x128xi1>, vector<32x128xf32>
    %cst_27 = arith.constant dense<0x7F800000> : vector<32xf32>
    %66 = vector.multi_reduction <minimumf>, %65, %cst_27 [1] : vector<32x128xf32> to vector<32xf32>
    %67 = vector.shape_cast %66 : vector<32xf32> to vector<32x1xf32>
    %68 = vector.broadcast %67 : vector<32x1xf32> to vector<32x128xf32>
    %69 = arith.cmpf oeq, %65, %68 : vector<32x128xf32>
    %c128_i32_28 = arith.constant 128 : i32
    %70 = vector.broadcast %c128_i32_28 : i32 to vector<32x128xi32>
    %71 = arith.select %69, %22, %70 : vector<32x128xi1>, vector<32x128xi32>
    %cst_29 = arith.constant dense<2147483647> : vector<32xi32>
    %72 = vector.multi_reduction <minsi>, %71, %cst_29 [1] : vector<32x128xi32> to vector<32xi32>
    %73 = vector.shape_cast %72 : vector<32xi32> to vector<32x1xi32>
    %74 = vector.broadcast %73 : vector<32x1xi32> to vector<32x128xi32>
    %75 = arith.cmpi eq, %22, %74 : vector<32x128xi32>
    %cst_30 = arith.constant 1.000000e-16 : f32
    %76 = vector.broadcast %cst_30 : f32 to vector<32x1xf32>
    %77 = arith.maximumf %67, %76 : vector<32x1xf32>
    %cst_31 = arith.constant 1.000000e+00 : f32
    %78 = vector.broadcast %cst_31 : f32 to vector<32x1xf32>
    %79 = arith.divf %78, %77 : vector<32x1xf32>
    %cst_32 = arith.constant 0.000000e+00 : f32
    %80 = vector.shape_cast %79 : vector<32x1xf32> to vector<32x1xf32>
    %81 = vector.broadcast %80 : vector<32x1xf32> to vector<32x128xf32>
    %82 = vector.broadcast %cst_32 : f32 to vector<32x128xf32>
    %83 = arith.select %75, %81, %82 : vector<32x128xi1>, vector<32x128xf32>
    %84 = arith.addf %63, %83 : vector<32x128xf32>
    %c0_33 = arith.constant 0 : index
    %c0_34 = arith.constant 0 : index
    %85 = vector.load %arg1[%c0_33, %c0_34] : memref<128x16xf32, #tpu.memory_space<vmem>>, vector<128x16xf32>
    %cst_35 = arith.constant dense<0.000000e+00> : vector<32x16xf32>
    %86 = tpu.matmul %84, %85, %cst_35 {dimension_numbers = #tpu.dot_dimension_numbers<[1], [0], [0], [1], [0, 0, 1, 1], [], []>} : vector<32x128xf32>, vector<128x16xf32>, vector<32x16xf32> -> vector<32x16xf32>
    %cst_36 = arith.constant dense<0.000000e+00> : vector<32xf32>
    %87 = vector.multi_reduction <add>, %84, %cst_36 [1] : vector<32x128xf32> to vector<32xf32>
    %88 = vector.shape_cast %87 : vector<32xf32> to vector<32x1xf32>
    %89 = vector.broadcast %88 : vector<32x1xf32> to vector<32x16xf32>
    %90 = arith.divf %86, %89 : vector<32x16xf32>
    %c0_37 = arith.constant 0 : index
    %c0_38 = arith.constant 0 : index
    %91 = vector.load %arg8[%c0_37, %c0_38] : memref<16x32xf32, #tpu.memory_space<vmem>>, vector<16x32xf32>
    %cst_39 = arith.constant dense<0.000000e+00> : vector<32x32xf32>
    %92 = tpu.matmul %90, %91, %cst_39 {dimension_numbers = #tpu.dot_dimension_numbers<[1], [0], [0], [1], [0, 0, 1, 1], [], []>} : vector<32x16xf32>, vector<16x32xf32>, vector<32x32xf32> -> vector<32x32xf32>
    %c0_40 = arith.constant 0 : index
    %c0_41 = arith.constant 0 : index
    %93 = vector.load %arg7[%c0_40, %c0_41] : memref<32x16xf32, #tpu.memory_space<vmem>>, vector<32x16xf32>
    %c0_42 = arith.constant 0 : index
    %c0_43 = arith.constant 0 : index
    %94 = vector.load %arg9[%c0_42, %c0_43] : memref<16x32xf32, #tpu.memory_space<vmem>>, vector<16x32xf32>
    %cst_44 = arith.constant dense<0.000000e+00> : vector<32x32xf32>
    %95 = tpu.matmul %93, %94, %cst_44 {dimension_numbers = #tpu.dot_dimension_numbers<[1], [0], [0], [1], [0, 0, 1, 1], [], []>} : vector<32x16xf32>, vector<16x32xf32>, vector<32x32xf32> -> vector<32x32xf32>
    %96 = arith.addf %92, %95 : vector<32x32xf32>
    %c0_45 = arith.constant 0 : index
    %c0_46 = arith.constant 0 : index
    %97 = vector.load %arg10[%c0_45, %c0_46] : memref<1x32xf32, #tpu.memory_space<vmem>>, vector<1x32xf32>
    %98 = vector.broadcast %97 : vector<1x32xf32> to vector<32x32xf32>
    %99 = arith.addf %96, %98 : vector<32x32xf32>
    %cst_47 = arith.constant 0.000000e+00 : f32
    %100 = vector.broadcast %cst_47 : f32 to vector<32x32xf32>
    %101 = arith.maximumf %99, %100 : vector<32x32xf32>
    %c0_48 = arith.constant 0 : index
    %c0_49 = arith.constant 0 : index
    %102 = vector.load %arg11[%c0_48, %c0_49] : memref<32x16xf32, #tpu.memory_space<vmem>>, vector<32x16xf32>
    %cst_50 = arith.constant dense<0.000000e+00> : vector<32x16xf32>
    %103 = tpu.matmul %101, %102, %cst_50 {dimension_numbers = #tpu.dot_dimension_numbers<[1], [0], [0], [1], [0, 0, 1, 1], [], []>} : vector<32x32xf32>, vector<32x16xf32>, vector<32x16xf32> -> vector<32x16xf32>
    %c0_51 = arith.constant 0 : index
    %c0_52 = arith.constant 0 : index
    %104 = vector.load %arg12[%c0_51, %c0_52] : memref<1x16xf32, #tpu.memory_space<vmem>>, vector<1x16xf32>
    %105 = vector.broadcast %104 : vector<1x16xf32> to vector<32x16xf32>
    %106 = arith.addf %103, %105 : vector<32x16xf32>
    %c0_53 = arith.constant 0 : index
    %c0_54 = arith.constant 0 : index
    %107 = vector.load %arg13[%c0_53, %c0_54] : memref<32x16xf32, #tpu.memory_space<vmem>>, vector<32x16xf32>
    tpu.vector_store %arg13[%c0_53, %c0_54], %106 {strides = array<i32>} : memref<32x16xf32, #tpu.memory_space<vmem>>, vector<32x16xf32>,
    return
  }
  func.func @transform_0(%arg0: i32) -> (i32, i32) {
    %c0_i32 = arith.constant 0 : i32
    %c0_i32_0 = arith.constant 0 : i32
    %c0_i32_1 = arith.constant 0 : i32
    return %c0_i32, %c0_i32_0 : i32, i32
  }
  func.func @transform_1(%arg0: i32) -> (i32, i32) {
    %c0_i32 = arith.constant 0 : i32
    %c0_i32_0 = arith.constant 0 : i32
    %c0_i32_1 = arith.constant 0 : i32
    return %c0_i32, %c0_i32_0 : i32, i32
  }
  func.func @transform_2(%arg0: i32) -> (i32, i32) {
    %c0_i32 = arith.constant 0 : i32
    %c0_i32_0 = arith.constant 0 : i32
    %c0_i32_1 = arith.constant 0 : i32
    return %c0_i32, %c0_i32_0 : i32, i32
  }
  func.func @transform_3(%arg0: i32) -> (i32, i32) {
    %c0_i32 = arith.constant 0 : i32
    %c0_i32_0 = arith.constant 0 : i32
    %c0_i32_1 = arith.constant 0 : i32
    return %c0_i32, %c0_i32_0 : i32, i32
  }
  func.func @transform_4(%arg0: i32) -> (i32, i32) {
    %c0_i32 = arith.constant 0 : i32
    %c0_i32_0 = arith.constant 0 : i32
    return %arg0, %c0_i32 : i32, i32
  }
  func.func @transform_5(%arg0: i32) -> (i32, i32) {
    %c0_i32 = arith.constant 0 : i32
    %c0_i32_0 = arith.constant 0 : i32
    return %arg0, %c0_i32 : i32, i32
  }
  func.func @transform_6(%arg0: i32) -> (i32, i32) {
    %c0_i32 = arith.constant 0 : i32
    %c0_i32_0 = arith.constant 0 : i32
    return %arg0, %c0_i32 : i32, i32
  }
  func.func @transform_7(%arg0: i32) -> (i32, i32) {
    %c0_i32 = arith.constant 0 : i32
    %c0_i32_0 = arith.constant 0 : i32
    %c0_i32_1 = arith.constant 0 : i32
    return %c0_i32, %c0_i32_0 : i32, i32
  }
  func.func @transform_8(%arg0: i32) -> (i32, i32) {
    %c0_i32 = arith.constant 0 : i32
    %c0_i32_0 = arith.constant 0 : i32
    %c0_i32_1 = arith.constant 0 : i32
    return %c0_i32, %c0_i32_0 : i32, i32
  }
  func.func @transform_9(%arg0: i32) -> (i32, i32) {
    %c0_i32 = arith.constant 0 : i32
    %c0_i32_0 = arith.constant 0 : i32
    %c0_i32_1 = arith.constant 0 : i32
    return %c0_i32, %c0_i32_0 : i32, i32
  }
  func.func @transform_10(%arg0: i32) -> (i32, i32) {
    %c0_i32 = arith.constant 0 : i32
    %c0_i32_0 = arith.constant 0 : i32
    %c0_i32_1 = arith.constant 0 : i32
    return %c0_i32, %c0_i32_0 : i32, i32
  }
  func.func @transform_11(%arg0: i32) -> (i32, i32) {
    %c0_i32 = arith.constant 0 : i32
    %c0_i32_0 = arith.constant 0 : i32
    %c0_i32_1 = arith.constant 0 : i32
    return %c0_i32, %c0_i32_0 : i32, i32
  }
  func.func @transform_12(%arg0: i32) -> (i32, i32) {
    %c0_i32 = arith.constant 0 : i32
    %c0_i32_0 = arith.constant 0 : i32
    return %arg0, %c0_i32 : i32, i32
  }
}

</mosaic_0001>

<llo_original>
// kernel: tpu_custom_call.1
$region0: #{tpu_custom_call.1}
  #allocation0 [shape = 'u32[]', space=smem, size = 0x4, offset = 0x4, fixed_abs, tag = 'smem constant byte address 0x4 - core index']
  #allocation1 [shape = 'u32[144,128]{1,0:T(1,128)}', space=vmem, size = 0x12000, scoped, tag = 'internal scratch']
  %s0 = inlined_call_operand.vmem [shape: f32[128,16], index: 0, kind: input, shape index: {}]
  %s1 = inlined_call_operand.vmem [shape: f32[3,128], index: 1, kind: input, shape index: {}]
  %s2 = inlined_call_operand.vmem [shape: f32[1,128], index: 2, kind: input, shape index: {}]
  %s3 = inlined_call_operand.vmem [shape: s32[1,128], index: 3, kind: input, shape index: {}]
  %s4 = inlined_call_operand.vmem [shape: f32[32,3], index: 4, kind: input, shape index: {}]
  %s5 = inlined_call_operand.vmem [shape: s32[32,1], index: 5, kind: input, shape index: {}]
  %s6 = inlined_call_operand.vmem [shape: f32[32,16], index: 6, kind: input, shape index: {}]
  %s7 = inlined_call_operand.vmem [shape: f32[16,32], index: 7, kind: input, shape index: {}]
  %s8 = inlined_call_operand.vmem [shape: f32[16,32], index: 8, kind: input, shape index: {}]
  %s9 = inlined_call_operand.vmem [shape: f32[1,32], index: 9, kind: input, shape index: {}]
  %s10 = inlined_call_operand.vmem [shape: f32[32,16], index: 10, kind: input, shape index: {}]
  %s11 = inlined_call_operand.vmem [shape: f32[1,16], index: 11, kind: input, shape index: {}]
  %s12 = inlined_call_operand.vmem [shape: f32[32,16], index: 12, kind: output, shape index: {}]
  %s13 = sld [smem:[#allocation0]]
  $region58: #{tpu_custom_call.1} parent=0
    _
  %s15 = ssub.s32 1, %s13
  %s16 = scalar_select 0, %s15, %s13
  // Predicated region
  $region2: #{tpu_custom_call.1} parent=0 // pred_check
    _
  $region3: #{tpu_custom_call.1} parent=0 // pred_check_branch
    %18 = sbr.rel (0) target = $region5
  $region4: #{tpu_custom_call.1} parent=0 // pred_region
    _
  $region5: #{tpu_custom_call.1} parent=0 // pred_fallthru
    _
  // Predicated region
  $region6: #{tpu_custom_call.1} parent=0 // pred_check
    _
  $region7: #{tpu_custom_call.1} parent=0 // pred_check_branch
    %20 = sbr.rel (0) target = $region9
  $region8: #{tpu_custom_call.1} parent=0 // pred_region
    _
  $region9: #{tpu_custom_call.1} parent=0 // pred_fallthru
    _
  // Predicated region
  $region10: #{tpu_custom_call.1} parent=0 // pred_check
    _
  $region11: #{tpu_custom_call.1} parent=0 // pred_check_branch
    %22 = sbr.rel (0) target = $region13
  $region12: #{tpu_custom_call.1} parent=0 // pred_region
    _
  $region13: #{tpu_custom_call.1} parent=0 // pred_fallthru
    _
  // Predicated region
  $region14: #{tpu_custom_call.1} parent=0 // pred_check
    _
  $region15: #{tpu_custom_call.1} parent=0 // pred_check_branch
    %24 = sbr.rel (0) target = $region17
  $region16: #{tpu_custom_call.1} parent=0 // pred_region
    _
  $region17: #{tpu_custom_call.1} parent=0 // pred_fallthru
    _
  // Predicated region
  $region18: #{tpu_custom_call.1} parent=0 // pred_check
    _
  $region19: #{tpu_custom_call.1} parent=0 // pred_check_branch
    %26 = sbr.rel (0) target = $region21
  $region20: #{tpu_custom_call.1} parent=0 // pred_region
    _
  $region21: #{tpu_custom_call.1} parent=0 // pred_fallthru
    _
  // Predicated region
  $region22: #{tpu_custom_call.1} parent=0 // pred_check
    _
  $region23: #{tpu_custom_call.1} parent=0 // pred_check_branch
    %28 = sbr.rel (0) target = $region25
  $region24: #{tpu_custom_call.1} parent=0 // pred_region
    _
  $region25: #{tpu_custom_call.1} parent=0 // pred_fallthru
    _
  // Predicated region
  $region26: #{tpu_custom_call.1} parent=0 // pred_check
    _
  $region27: #{tpu_custom_call.1} parent=0 // pred_check_branch
    %30 = sbr.rel (0) target = $region29
  $region28: #{tpu_custom_call.1} parent=0 // pred_region
    _
  $region29: #{tpu_custom_call.1} parent=0 // pred_fallthru
    _
  // Predicated region
  $region30: #{tpu_custom_call.1} parent=0 // pred_check
    _
  $region31: #{tpu_custom_call.1} parent=0 // pred_check_branch
    %32 = sbr.rel (0) target = $region33
  $region32: #{tpu_custom_call.1} parent=0 // pred_region
    _
  $region33: #{tpu_custom_call.1} parent=0 // pred_fallthru
    _
  // Predicated region
  $region34: #{tpu_custom_call.1} parent=0 // pred_check
    _
  $region35: #{tpu_custom_call.1} parent=0 // pred_check_branch
    %34 = sbr.rel (0) target = $region37
  $region36: #{tpu_custom_call.1} parent=0 // pred_region
    _
  $region37: #{tpu_custom_call.1} parent=0 // pred_fallthru
    _
  // Predicated region
  $region38: #{tpu_custom_call.1} parent=0 // pred_check
    _
  $region39: #{tpu_custom_call.1} parent=0 // pred_check_branch
    %36 = sbr.rel (0) target = $region41
  $region40: #{tpu_custom_call.1} parent=0 // pred_region
    _
  $region41: #{tpu_custom_call.1} parent=0 // pred_fallthru
    _
  // Predicated region
  $region42: #{tpu_custom_call.1} parent=0 // pred_check
    _
  $region43: #{tpu_custom_call.1} parent=0 // pred_check_branch
    %38 = sbr.rel (0) target = $region45
  $region44: #{tpu_custom_call.1} parent=0 // pred_region
    _
  $region45: #{tpu_custom_call.1} parent=0 // pred_fallthru
    _
  // Predicated region
  $region46: #{tpu_custom_call.1} parent=0 // pred_check
    _
  $region47: #{tpu_custom_call.1} parent=0 // pred_check_branch
    %40 = sbr.rel (0) target = $region49
  $region48: #{tpu_custom_call.1} parent=0 // pred_region
    _
  $region49: #{tpu_custom_call.1} parent=0 // pred_fallthru
    _
  %v41 = vld [vmem:[%s4] sm:$0xff]
  %v42 = vld [vmem:[%s4 + $0x8] sm:$0xff]
  %v43 = vld [vmem:[%s4 + $0x10] sm:$0xff]
  %v44 = vld [vmem:[%s4 + $0x18] sm:$0xff]
  %v45 = vmul.f32 %v41, %v41
  %v46 = vmul.f32 %v42, %v42
  %v47 = vmul.f32 %v43, %v43
  %v48 = vmul.f32 %v44, %v44
  %vm49 = vcmask 23552
  %v50 = vsel %vm49, %v45, 0.0
  %51 = vadd.xlane.f32.xlu0 %v50
  %v52 = vpop.xlane.xlu0 %51
  %v53 = vsel %vm49, %v46, 0.0
  %54 = vadd.xlane.f32.xlu0 %v53
  %v55 = vpop.xlane.xlu0 %54
  %v56 = vsel %vm49, %v47, 0.0
  %57 = vadd.xlane.f32.xlu0 %v56
  %v58 = vpop.xlane.xlu0 %57
  %v59 = vsel %vm49, %v48, 0.0
  %60 = vadd.xlane.f32.xlu0 %v59
  %v61 = vpop.xlane.xlu0 %60
  %v62 = vld [vmem:[%s1] sm:$0x7]
  %v64 = vsel %vm49, %v41, 0
  %v67 = vsel %vm49, %v42, 0
  %v70 = vsel %vm49, %v43, 0
  %v73 = vsel %vm49, %v44, 0
  %vm75 = vcmask 1042432
  %v77 = vsel %vm75, %v62, 0
  %79 = vmatprep.subr.mxu0 0.0
  %80 = vmatpush1.msra.mxu0 %v77
  %81 = vmatprep.subr.mxu0 0.0
  %82 = vmatpush1.msra.mxu0 0.0
  %83 = vmatprep.subr.mxu0 0.0
  %84 = vmatpush1.msra.mxu0 0.0
  %85 = vmatprep.subr.mxu0 0.0
  %86 = vmatpush1.msra.mxu0 0.0
  %87 = vmatprep.subr.mxu0 0.0
  %88 = vmatpush1.msra.mxu0 0.0
  %89 = vmatprep.subr.mxu0 0.0
  %90 = vmatpush1.msra.mxu0 0.0
  %91 = vmatprep.subr.mxu0 0.0
  %92 = vmatpush1.msra.mxu0 0.0
  %93 = vmatprep.subr.mxu0 0.0
  %94 = vmatpush1.msra.mxu0 0.0
  %95 = vmatprep.subr.mxu0 0.0
  %96 = vmatpush1.msra.mxu0 0.0
  %97 = vmatprep.subr.mxu0 0.0
  %98 = vmatpush1.msra.mxu0 0.0
  %99 = vmatprep.subr.mxu0 0.0
  %100 = vmatpush1.msra.mxu0 0.0
  %101 = vmatprep.subr.mxu0 0.0
  %102 = vmatpush1.msra.mxu0 0.0
  %103 = vmatprep.subr.mxu0 0.0
  %104 = vmatpush1.msra.mxu0 0.0
  %105 = vmatprep.subr.mxu0 0.0
  %106 = vmatpush1.msra.mxu0 0.0
  %107 = vmatprep.subr.mxu0 0.0
  %108 = vmatpush1.msra.mxu0 0.0
  %109 = vmatprep.subr.mxu0 0.0
  %110 = vmatpush1.msra.mxu0 0.0
  %111 = vmatprep.subr.mxu0 0.0
  %112 = vmatpush1.msra.mxu0 0.0
  %113 = vmatprep.subr.mxu0 0.0
  %114 = vmatpush1.msra.mxu0 0.0
  %115 = vmatprep.subr.mxu0 0.0
  %116 = vmatpush1.msra.mxu0 0.0
  %117 = vmatprep.subr.mxu0 0.0
  %118 = vmatpush1.msra.mxu0 0.0
  %119 = vmatprep.subr.mxu0 0.0
  %120 = vmatpush1.msra.mxu0 0.0
  %121 = vmatprep.subr.mxu0 0.0
  %122 = vmatpush1.msra.mxu0 0.0
  %123 = vmatprep.subr.mxu0 0.0
  %124 = vmatpush1.msra.mxu0 0.0
  %125 = vmatprep.subr.mxu0 0.0
  %126 = vmatpush1.msra.mxu0 0.0
  %127 = vmatprep.subr.mxu0 0.0
  %128 = vmatpush1.msra.mxu0 0.0
  %129 = vmatprep.subr.mxu0 0.0
  %130 = vmatpush1.msra.mxu0 0.0
  %131 = vmatprep.subr.mxu0 0.0
  %132 = vmatpush1.msra.mxu0 0.0
  %133 = vmatprep.subr.mxu0 0.0
  %134 = vmatpush1.msra.mxu0 0.0
  %135 = vmatprep.subr.mxu0 0.0
  %136 = vmatpush1.msra.mxu0 0.0
  %137 = vmatprep.subr.mxu0 0.0
  %138 = vmatpush1.msra.mxu0 0.0
  %139 = vmatprep.subr.mxu0 0.0
  %140 = vmatpush1.msra.mxu0 0.0
  %141 = vmatprep.subr.mxu0 0.0
  %142 = vmatpush1.msra.mxu0 0.0
  %143 = vmatprep.mubr.f32.mxu0 0.0
  %144 = vmatmul.mubr.f32.gmra.mrb[0].mxu0 %v64
  %v145 = vpop.f32.mrb[0].mxu0
  %v146 = vadd.f32 0.0, %v145
  %v147 = vpop.f32.mrb[0].mxu0
  %148 = vmatprep.mubr.f32.mxu0 0.0
  %149 = vmatmul.mubr.f32.gmra.mrb[0].mxu0 %v67
  %v150 = vpop.f32.mrb[0].mxu0
  %v151 = vadd.f32 0.0, %v150
  %v152 = vpop.f32.mrb[0].mxu0
  %153 = vmatprep.mubr.f32.mxu0 0.0
  %154 = vmatmul.mubr.f32.gmra.mrb[0].mxu0 %v70
  %v155 = vpop.f32.mrb[0].mxu0
  %v156 = vadd.f32 0.0, %v155
  %v157 = vpop.f32.mrb[0].mxu0
  %158 = vmatprep.mubr.f32.mxu0 0.0
  %159 = vmatmul.mubr.f32.gmra.mrb[0].mxu0 %v73
  %v160 = vpop.f32.mrb[0].mxu0
  %v161 = vadd.f32 0.0, %v160
  %v162 = vpop.f32.mrb[0].mxu0
  %163 = vdwg.mxu0
  %v164 = vld [vmem:[%s2] sm:$0x1]
  %v166 = vlaneseq
  %v167 = vshrl.u32 %v166, 7
  %v168 = vsub.s32 0, %v167
  %v169 = vrot.slane %v164, %v168
  %v171 = vadd.f32 %v52, %v169
  %v172 = vadd.f32 %v55, %v169
  %v173 = vadd.f32 %v58, %v169
  %v174 = vadd.f32 %v61, %v169
  %v175 = vmul.f32 %v146, 2.0
  %v176 = vmul.f32 %v151, 2.0
  %v177 = vmul.f32 %v156, 2.0
  %v178 = vmul.f32 %v161, 2.0
  %v179 = vsub.f32 %v171, %v175
  %v180 = vsub.f32 %v172, %v176
  %v181 = vsub.f32 %v173, %v177
  %v182 = vsub.f32 %v174, %v178
  %v183 = vmax.f32 %v179, 0.0
  %v184 = vmax.f32 %v180, 0.0
  %v185 = vmax.f32 %v181, 0.0
  %v186 = vmax.f32 %v182, 0.0
  %v187 = vld [vmem:[%s5] sm:$0xff]
  %v188 = vld [vmem:[%s5 + $0x8] sm:$0xff]
  %v189 = vld [vmem:[%s5 + $0x10] sm:$0xff]
  %v190 = vld [vmem:[%s5 + $0x18] sm:$0xff]
  %v191 = vld [vmem:[%s3] sm:$0x1]
  %192 = vset.pattern.permute.xlu0 0
  %193 = vperm.xlu0 %192, %v187
  %v194 = vpop.permute.xlu0 %193
  %195 = vset.pattern.permute.xlu0 0
  %196 = vperm.xlu0 %195, %v188
  %v197 = vpop.permute.xlu0 %196
  %198 = vset.pattern.permute.xlu0 0
  %199 = vperm.xlu0 %198, %v189
  %v200 = vpop.permute.xlu0 %199
  %201 = vset.pattern.permute.xlu0 0
  %202 = vperm.xlu0 %201, %v190
  %v203 = vpop.permute.xlu0 %202
  %v204 = vlaneseq
  %v205 = vshrl.u32 %v204, 7
  %v206 = vsub.s32 0, %v205
  %v207 = vrot.slane %v191, %v206
  %vm208 = vcmp.eq.s32.totalorder %v194, %v207
  %vm209 = vcmp.eq.s32.totalorder %v197, %v207
  %vm210 = vcmp.eq.s32.totalorder %v200, %v207
  %vm211 = vcmp.eq.s32.totalorder %v203, %v207
  %v212 = vsel %vm208, %v183, 1e+30
  %v213 = vsel %vm209, %v184, 1e+30
  %v214 = vsel %vm210, %v185, 1e+30
  %v215 = vsel %vm211, %v186, 1e+30
  %v216 = vlaneseq
  %v217 = vand.u32 %v216, 127
  %218 = vmin.xlane.f32.xlu0 %v212
  %v219 = vpop.xlane.xlu0 %218
  %220 = vmin.xlane.f32.xlu0 %v213
  %v221 = vpop.xlane.xlu0 %220
  %222 = vmin.xlane.f32.xlu0 %v214
  %v223 = vpop.xlane.xlu0 %222
  %224 = vmin.xlane.f32.xlu0 %v215
  %v225 = vpop.xlane.xlu0 %224
  %vm226 = vcmp.eq.f32.partialorder %v212, %v219
  %vm227 = vcmp.eq.f32.partialorder %v213, %v221
  %vm228 = vcmp.eq.f32.partialorder %v214, %v223
  %vm229 = vcmp.eq.f32.partialorder %v215, %v225
  %v230 = vsel %vm226, %v217, 128
  %v231 = vsel %vm227, %v217, 128
  %v232 = vsel %vm228, %v217, 128
  %v233 = vsel %vm229, %v217, 128
  %v234 = vand.u32 %v230, 65535
  %v235 = vshra.s32 %v230, 16
  %v236 = vcvt.s32.f32 %v234
  %v237 = vcvt.s32.f32 %v235
  %238 = vmin.xlane.f32.xlu0 %v237
  %v239 = vpop.xlane.xlu0 %238
  %vm240 = vcmp.eq.f32.partialorder %v237, %v239
  %v241 = vsel %vm240, %v236, inf
  %242 = vmin.xlane.f32.xlu0 %v241
  %v243 = vpop.xlane.xlu0 %242
  %v244 = vcvt.f32.s32 %v243
  %v245 = vcvt.f32.s32 %v239
  %v246 = vshll.u32 %v245, 16
  %v247 = vadd.s32 %v246, %v244
  %v248 = vand.u32 %v231, 65535
  %v249 = vshra.s32 %v231, 16
  %v250 = vcvt.s32.f32 %v248
  %v251 = vcvt.s32.f32 %v249
  %252 = vmin.xlane.f32.xlu0 %v251
  %v253 = vpop.xlane.xlu0 %252
  %vm254 = vcmp.eq.f32.partialorder %v251, %v253
  %v255 = vsel %vm254, %v250, inf
  %256 = vmin.xlane.f32.xlu0 %v255
  %v257 = vpop.xlane.xlu0 %256
  %v258 = vcvt.f32.s32 %v257
  %v259 = vcvt.f32.s32 %v253
  %v260 = vshll.u32 %v259, 16
  %v261 = vadd.s32 %v260, %v258
  %v262 = vand.u32 %v232, 65535
  %v263 = vshra.s32 %v232, 16
  %v264 = vcvt.s32.f32 %v262
  %v265 = vcvt.s32.f32 %v263
  %266 = vmin.xlane.f32.xlu0 %v265
  %v267 = vpop.xlane.xlu0 %266
  %vm268 = vcmp.eq.f32.partialorder %v265, %v267
  %v269 = vsel %vm268, %v264, inf
  %270 = vmin.xlane.f32.xlu0 %v269
  %v271 = vpop.xlane.xlu0 %270
  %v272 = vcvt.f32.s32 %v271
  %v273 = vcvt.f32.s32 %v267
  %v274 = vshll.u32 %v273, 16
  %v275 = vadd.s32 %v274, %v272
  %v276 = vand.u32 %v233, 65535
  %v277 = vshra.s32 %v233, 16
  %v278 = vcvt.s32.f32 %v276
  %v279 = vcvt.s32.f32 %v277
  %280 = vmin.xlane.f32.xlu0 %v279
  %v281 = vpop.xlane.xlu0 %280
  %vm282 = vcmp.eq.f32.partialorder %v279, %v281
  %v283 = vsel %vm282, %v278, inf
  %284 = vmin.xlane.f32.xlu0 %v283
  %v285 = vpop.xlane.xlu0 %284
  %v286 = vcvt.f32.s32 %v285
  %v287 = vcvt.f32.s32 %v281
  %v288 = vshll.u32 %v287, 16
  %v289 = vadd.s32 %v288, %v286
  %vm290 = vcmp.eq.s32.totalorder %v217, %v247
  %vm291 = vcmp.eq.s32.totalorder %v217, %v261
  %vm292 = vcmp.eq.s32.totalorder %v217, %v275
  %vm293 = vcmp.eq.s32.totalorder %v217, %v289
  %v294 = vmax.f32 %v219, 1e-16
  %v295 = vmax.f32 %v221, 1e-16
  %v296 = vmax.f32 %v223, 1e-16
  %v297 = vmax.f32 %v225, 1e-16
  %v298 = vrcp.pop %v294
  %v299 = vmul.f32 1.0, %v298
  %v300 = vrcp.pop %v295
  %v301 = vmul.f32 1.0, %v300
  %v302 = vrcp.pop %v296
  %v303 = vmul.f32 1.0, %v302
  %v304 = vrcp.pop %v297
  %v305 = vmul.f32 1.0, %v304
  %v306 = vsel %vm290, %v299, 0.0
  %v307 = vsel %vm291, %v301, 0.0
  %v308 = vsel %vm292, %v303, 0.0
  %v309 = vsel %vm293, %v305, 0.0
  %v310 = vadd.f32 %v306, 0.0
  %v311 = vadd.f32 %v307, 0.0
  %v312 = vadd.f32 %v308, 0.0
  %v313 = vadd.f32 %v309, 0.0
  %v314 = vsel %vm290, 1e+30, %v212
  %v315 = vsel %vm291, 1e+30, %v213
  %v316 = vsel %vm292, 1e+30, %v214
  %v317 = vsel %vm293, 1e+30, %v215
  %318 = vmin.xlane.f32.xlu0 %v314
  %v319 = vpop.xlane.xlu0 %318
  %320 = vmin.xlane.f32.xlu0 %v315
  %v321 = vpop.xlane.xlu0 %320
  %322 = vmin.xlane.f32.xlu0 %v316
  %v323 = vpop.xlane.xlu0 %322
  %324 = vmin.xlane.f32.xlu0 %v317
  %v325 = vpop.xlane.xlu0 %324
  %vm326 = vcmp.eq.f32.partialorder %v314, %v319
  %vm327 = vcmp.eq.f32.partialorder %v315, %v321
  %vm328 = vcmp.eq.f32.partialorder %v316, %v323
  %vm329 = vcmp.eq.f32.partialorder %v317, %v325
  %v330 = vsel %vm326, %v217, 128
  %v331 = vsel %vm327, %v217, 128
  %v332 = vsel %vm328, %v217, 128
  %v333 = vsel %vm329, %v217, 128
  %v334 = vand.u32 %v330, 65535
  %v335 = vshra.s32 %v330, 16
  %v336 = vcvt.s32.f32 %v334
  %v337 = vcvt.s32.f32 %v335
  %338 = vmin.xlane.f32.xlu0 %v337
  %v339 = vpop.xlane.xlu0 %338
  %vm340 = vcmp.eq.f32.partialorder %v337, %v339
  %v341 = vsel %vm340, %v336, inf
  %342 = vmin.xlane.f32.xlu0 %v341
  %v343 = vpop.xlane.xlu0 %342
  %v344 = vcvt.f32.s32 %v343
  %v345 = vcvt.f32.s32 %v339
  %v346 = vshll.u32 %v345, 16
  %v347 = vadd.s32 %v346, %v344
  %v348 = vand.u32 %v331, 65535
  %v349 = vshra.s32 %v331, 16
  %v350 = vcvt.s32.f32 %v348
  %v351 = vcvt.s32.f32 %v349
  %352 = vmin.xlane.f32.xlu0 %v351
  %v353 = vpop.xlane.xlu0 %352
  %vm354 = vcmp.eq.f32.partialorder %v351, %v353
  %v355 = vsel %vm354, %v350, inf
  %356 = vmin.xlane.f32.xlu0 %v355
  %v357 = vpop.xlane.xlu0 %356
  %v358 = vcvt.f32.s32 %v357
  %v359 = vcvt.f32.s32 %v353
  %v360 = vshll.u32 %v359, 16
  %v361 = vadd.s32 %v360, %v358
  %v362 = vand.u32 %v332, 65535
  %v363 = vshra.s32 %v332, 16
  %v364 = vcvt.s32.f32 %v362
  %v365 = vcvt.s32.f32 %v363
  %366 = vmin.xlane.f32.xlu0 %v365
  %v367 = vpop.xlane.xlu0 %366
  %vm368 = vcmp.eq.f32.partialorder %v365, %v367
  %v369 = vsel %vm368, %v364, inf
  %370 = vmin.xlane.f32.xlu0 %v369
  %v371 = vpop.xlane.xlu0 %370
  %v372 = vcvt.f32.s32 %v371
  %v373 = vcvt.f32.s32 %v367
  %v374 = vshll.u32 %v373, 16
  %v375 = vadd.s32 %v374, %v372
  %v376 = vand.u32 %v333, 65535
  %v377 = vshra.s32 %v333, 16
  %v378 = vcvt.s32.f32 %v376
  %v379 = vcvt.s32.f32 %v377
  %380 = vmin.xlane.f32.xlu0 %v379
  %v381 = vpop.xlane.xlu0 %380
  %vm382 = vcmp.eq.f32.partialorder %v379, %v381
  %v383 = vsel %vm382, %v378, inf
  %384 = vmin.xlane.f32.xlu0 %v383
  %v385 = vpop.xlane.xlu0 %384
  %v386 = vcvt.f32.s32 %v385
  %v387 = vcvt.f32.s32 %v381
  %v388 = vshll.u32 %v387, 16
  %v389 = vadd.s32 %v388, %v386
  %vm390 = vcmp.eq.s32.totalorder %v217, %v347
  %vm391 = vcmp.eq.s32.totalorder %v217, %v361
  %vm392 = vcmp.eq.s32.totalorder %v217, %v375
  %vm393 = vcmp.eq.s32.totalorder %v217, %v389
  %v394 = vmax.f32 %v319, 1e-16
  %v395 = vmax.f32 %v321, 1e-16
  %v396 = vmax.f32 %v323, 1e-16
  %v397 = vmax.f32 %v325, 1e-16
  %v398 = vrcp.pop %v394
  %v399 = vmul.f32 1.0, %v398
  %v400 = vrcp.pop %v395
  %v401 = vmul.f32 1.0, %v400
  %v402 = vrcp.pop %v396
  %v403 = vmul.f32 1.0, %v402
  %v404 = vrcp.pop %v397
  %v405 = vmul.f32 1.0, %v404
  %v406 = vsel %vm390, %v399, 0.0
  %v407 = vsel %vm391, %v401, 0.0
  %v408 = vsel %vm392, %v403, 0.0
  %v409 = vsel %vm393, %v405, 0.0
  %v410 = vadd.f32 %v310, %v406
  %v411 = vadd.f32 %v311, %v407
  %v412 = vadd.f32 %v312, %v408
  %v413 = vadd.f32 %v313, %v409
  %v414 = vsel %vm390, 1e+30, %v314
  %v415 = vsel %vm391, 1e+30, %v315
  %v416 = vsel %vm392, 1e+30, %v316
  %v417 = vsel %vm393, 1e+30, %v317
  %418 = vmin.xlane.f32.xlu0 %v414
  %v419 = vpop.xlane.xlu0 %418
  %420 = vmin.xlane.f32.xlu0 %v415
  %v421 = vpop.xlane.xlu0 %420
  %422 = vmin.xlane.f32.xlu0 %v416
  %v423 = vpop.xlane.xlu0 %422
  %424 = vmin.xlane.f32.xlu0 %v417
  %v425 = vpop.xlane.xlu0 %424
  %vm426 = vcmp.eq.f32.partialorder %v414, %v419
  %vm427 = vcmp.eq.f32.partialorder %v415, %v421
  %vm428 = vcmp.eq.f32.partialorder %v416, %v423
  %vm429 = vcmp.eq.f32.partialorder %v417, %v425
  %v430 = vsel %vm426, %v217, 128
  %v431 = vsel %vm427, %v217, 128
  %v432 = vsel %vm428, %v217, 128
  %v433 = vsel %vm429, %v217, 128
  %v434 = vand.u32 %v430, 65535
  %v435 = vshra.s32 %v430, 16
  %v436 = vcvt.s32.f32 %v434
  %v437 = vcvt.s32.f32 %v435
  %438 = vmin.xlane.f32.xlu0 %v437
  %v439 = vpop.xlane.xlu0 %438
  %vm440 = vcmp.eq.f32.partialorder %v437, %v439
  %v441 = vsel %vm440, %v436, inf
  %442 = vmin.xlane.f32.xlu0 %v441
  %v443 = vpop.xlane.xlu0 %442
  %v444 = vcvt.f32.s32 %v443
  %v445 = vcvt.f32.s32 %v439
  %v446 = vshll.u32 %v445, 16
  %v447 = vadd.s32 %v446, %v444
  %v448 = vand.u32 %v431, 65535
  %v449 = vshra.s32 %v431, 16
  %v450 = vcvt.s32.f32 %v448
  %v451 = vcvt.s32.f32 %v449
  %452 = vmin.xlane.f32.xlu0 %v451
  %v453 = vpop.xlane.xlu0 %452
  %vm454 = vcmp.eq.f32.partialorder %v451, %v453
  %v455 = vsel %vm454, %v450, inf
  %456 = vmin.xlane.f32.xlu0 %v455
  %v457 = vpop.xlane.xlu0 %456
  %v458 = vcvt.f32.s32 %v457
  %v459 = vcvt.f32.s32 %v453
  %v460 = vshll.u32 %v459, 16
  %v461 = vadd.s32 %v460, %v458
  %v462 = vand.u32 %v432, 65535
  %v463 = vshra.s32 %v432, 16
  %v464 = vcvt.s32.f32 %v462
  %v465 = vcvt.s32.f32 %v463
  %466 = vmin.xlane.f32.xlu0 %v465
  %v467 = vpop.xlane.xlu0 %466
  %vm468 = vcmp.eq.f32.partialorder %v465, %v467
  %v469 = vsel %vm468, %v464, inf
  %470 = vmin.xlane.f32.xlu0 %v469
  %v471 = vpop.xlane.xlu0 %470
  %v472 = vcvt.f32.s32 %v471
  %v473 = vcvt.f32.s32 %v467
  %v474 = vshll.u32 %v473, 16
  %v475 = vadd.s32 %v474, %v472
  %v476 = vand.u32 %v433, 65535
  %v477 = vshra.s32 %v433, 16
  %v478 = vcvt.s32.f32 %v476
  %v479 = vcvt.s32.f32 %v477
  %480 = vmin.xlane.f32.xlu0 %v479
  %v481 = vpop.xlane.xlu0 %480
  %vm482 = vcmp.eq.f32.partialorder %v479, %v481
  %v483 = vsel %vm482, %v478, inf
  %484 = vmin.xlane.f32.xlu0 %v483
  %v485 = vpop.xlane.xlu0 %484
  %v486 = vcvt.f32.s32 %v485
  %v487 = vcvt.f32.s32 %v481
  %v488 = vshll.u32 %v487, 16
  %v489 = vadd.s32 %v488, %v486
  %vm490 = vcmp.eq.s32.totalorder %v217, %v447
  %vm491 = vcmp.eq.s32.totalorder %v217, %v461
  %vm492 = vcmp.eq.s32.totalorder %v217, %v475
  %vm493 = vcmp.eq.s32.totalorder %v217, %v489
  %v494 = vmax.f32 %v419, 1e-16
  %v495 = vmax.f32 %v421, 1e-16
  %v496 = vmax.f32 %v423, 1e-16
  %v497 = vmax.f32 %v425, 1e-16
  %v498 = vrcp.pop %v494
  %v499 = vmul.f32 1.0, %v498
  %v500 = vrcp.pop %v495
  %v501 = vmul.f32 1.0, %v500
  %v502 = vrcp.pop %v496
  %v503 = vmul.f32 1.0, %v502
  %v504 = vrcp.pop %v497
  %v505 = vmul.f32 1.0, %v504
  %v506 = vsel %vm490, %v499, 0.0
  %v507 = vsel %vm491, %v501, 0.0
  %v508 = vsel %vm492, %v503, 0.0
  %v509 = vsel %vm493, %v505, 0.0
  %v510 = vadd.f32 %v410, %v506
  %v511 = vadd.f32 %v411, %v507
  %v512 = vadd.f32 %v412, %v508
  %v513 = vadd.f32 %v413, %v509
  %v514 = vld [vmem:[%s0] sm:$0xff]
  %v515 = vld [vmem:[%s0 + $0x8] sm:$0xff]
  %v516 = vld [vmem:[%s0 + $0x10] sm:$0xff]
  %v517 = vld [vmem:[%s0 + $0x18] sm:$0xff]
  %v518 = vld [vmem:[%s0 + $0x20] sm:$0xff]
  %v519 = vld [vmem:[%s0 + $0x28] sm:$0xff]
  %v520 = vld [vmem:[%s0 + $0x30] sm:$0xff]
  %v521 = vld [vmem:[%s0 + $0x38] sm:$0xff]
  %v522 = vld [vmem:[%s0 + $0x40] sm:$0xff]
  %v523 = vld [vmem:[%s0 + $0x48] sm:$0xff]
  %v524 = vld [vmem:[%s0 + $0x50] sm:$0xff]
  %v525 = vld [vmem:[%s0 + $0x58] sm:$0xff]
  %v526 = vld [vmem:[%s0 + $0x60] sm:$0xff]
  %v527 = vld [vmem:[%s0 + $0x68] sm:$0xff]
  %v528 = vld [vmem:[%s0 + $0x70] sm:$0xff]
  %v529 = vld [vmem:[%s0 + $0x78] sm:$0xff]
  %530 = vmatprep.subr.mxu0 0.0
  %531 = vmatpush1.msra.mxu0 %v514
  %532 = vmatprep.subr.mxu0 0.0
  %533 = vmatpush1.msra.mxu0 %v515
  %534 = vmatprep.subr.mxu0 0.0
  %535 = vmatpush1.msra.mxu0 %v516
  %536 = vmatprep.subr.mxu0 0.0
  %537 = vmatpush1.msra.mxu0 %v517
  %538 = vmatprep.subr.mxu0 0.0
  %539 = vmatpush1.msra.mxu0 %v518
  %540 = vmatprep.subr.mxu0 0.0
  %541 = vmatpush1.msra.mxu0 %v519
  %542 = vmatprep.subr.mxu0 0.0
  %543 = vmatpush1.msra.mxu0 %v520
  %544 = vmatprep.subr.mxu0 0.0
  %545 = vmatpush1.msra.mxu0 %v521
  %546 = vmatprep.subr.mxu0 0.0
  %547 = vmatpush1.msra.mxu0 %v522
  %548 = vmatprep.subr.mxu0 0.0
  %549 = vmatpush1.msra.mxu0 %v523
  %550 = vmatprep.subr.mxu0 0.0
  %551 = vmatpush1.msra.mxu0 %v524
  %552 = vmatprep.subr.mxu0 0.0
  %553 = vmatpush1.msra.mxu0 %v525
  %554 = vmatprep.subr.mxu0 0.0
  %555 = vmatpush1.msra.mxu0 %v526
  %556 = vmatprep.subr.mxu0 0.0
  %557 = vmatpush1.msra.mxu0 %v527
  %558 = vmatprep.subr.mxu0 0.0
  %559 = vmatpush1.msra.mxu0 %v528
  %560 = vmatprep.subr.mxu0 0.0
  %561 = vmatpush1.msra.mxu0 %v529
  %562 = vmatprep.subr.mxu0 0.0
  %563 = vmatpush1.msra.mxu0 0.0
  %564 = vmatprep.subr.mxu0 0.0
  %565 = vmatpush1.msra.mxu0 0.0
  %566 = vmatprep.subr.mxu0 0.0
  %567 = vmatpush1.msra.mxu0 0.0
  %568 = vmatprep.subr.mxu0 0.0
  %569 = vmatpush1.msra.mxu0 0.0
  %570 = vmatprep.subr.mxu0 0.0
  %571 = vmatpush1.msra.mxu0 0.0
  %572 = vmatprep.subr.mxu0 0.0
  %573 = vmatpush1.msra.mxu0 0.0
  %574 = vmatprep.subr.mxu0 0.0
  %575 = vmatpush1.msra.mxu0 0.0
  %576 = vmatprep.subr.mxu0 0.0
  %577 = vmatpush1.msra.mxu0 0.0
  %578 = vmatprep.subr.mxu0 0.0
  %579 = vmatpush1.msra.mxu0 0.0
  %580 = vmatprep.subr.mxu0 0.0
  %581 = vmatpush1.msra.mxu0 0.0
  %582 = vmatprep.subr.mxu0 0.0
  %583 = vmatpush1.msra.mxu0 0.0
  %584 = vmatprep.subr.mxu0 0.0
  %585 = vmatpush1.msra.mxu0 0.0
  %586 = vmatprep.subr.mxu0 0.0
  %587 = vmatpush1.msra.mxu0 0.0
  %588 = vmatprep.subr.mxu0 0.0
  %589 = vmatpush1.msra.mxu0 0.0
  %590 = vmatprep.subr.mxu0 0.0
  %591 = vmatpush1.msra.mxu0 0.0
  %592 = vmatprep.subr.mxu0 0.0
  %593 = vmatpush1.msra.mxu0 0.0
  %594 = vmatprep.mubr.f32.mxu0 0.0
  %595 = vmatmul.mubr.f32.gmra.mrb[0].mxu0 %v510
  %v596 = vpop.f32.mrb[0].mxu0
  %v597 = vadd.f32 0.0, %v596
  %v598 = vpop.f32.mrb[0].mxu0
  %599 = vmatprep.mubr.f32.mxu0 0.0
  %600 = vmatmul.mubr.f32.gmra.mrb[0].mxu0 %v511
  %v601 = vpop.f32.mrb[0].mxu0
  %v602 = vadd.f32 0.0, %v601
  %v603 = vpop.f32.mrb[0].mxu0
  %604 = vmatprep.mubr.f32.mxu0 0.0
  %605 = vmatmul.mubr.f32.gmra.mrb[0].mxu0 %v512
  %v606 = vpop.f32.mrb[0].mxu0
  %v607 = vadd.f32 0.0, %v606
  %v608 = vpop.f32.mrb[0].mxu0
  %609 = vmatprep.mubr.f32.mxu0 0.0
  %610 = vmatmul.mubr.f32.gmra.mrb[0].mxu0 %v513
  %v611 = vpop.f32.mrb[0].mxu0
  %v612 = vadd.f32 0.0, %v611
  %v613 = vpop.f32.mrb[0].mxu0
  %614 = vdwg.mxu0
  %615 = vadd.xlane.f32.xlu0 %v510
  %v616 = vpop.xlane.xlu0 %615
  %617 = vadd.xlane.f32.xlu0 %v511
  %v618 = vpop.xlane.xlu0 %617
  %619 = vadd.xlane.f32.xlu0 %v512
  %v620 = vpop.xlane.xlu0 %619
  %621 = vadd.xlane.f32.xlu0 %v513
  %v622 = vpop.xlane.xlu0 %621
  %v623 = vrcp.pop %v616
  %v624 = vmul.f32 %v597, %v623
  %v625 = vrcp.pop %v618
  %v626 = vmul.f32 %v602, %v625
  %v627 = vrcp.pop %v620
  %v628 = vmul.f32 %v607, %v627
  %v629 = vrcp.pop %v622
  %v630 = vmul.f32 %v612, %v629
  %v631 = vld [vmem:[%s7] sm:$0xff]
  %v632 = vld [vmem:[%s7 + $0x8] sm:$0xff]
  %v633 = vld [vmem:[%s6] sm:$0xff]
  %v634 = vld [vmem:[%s6 + $0x8] sm:$0xff]
  %v635 = vld [vmem:[%s6 + $0x10] sm:$0xff]
  %v636 = vld [vmem:[%s6 + $0x18] sm:$0xff]
  %v637 = vld [vmem:[%s8] sm:$0xff]
  %v638 = vld [vmem:[%s8 + $0x8] sm:$0xff]
  %vm639 = vcmask 130048
  %v641 = vsel %vm639, %v633, 0
  %v644 = vsel %vm639, %v634, 0
  %v647 = vsel %vm639, %v635, 0
  %v650 = vsel %vm639, %v636, 0
  %652 = vmatprep.subr.mxu0 0.0
  %653 = vmatpush1.msra.mxu0 %v637
  %654 = vmatprep.subr.mxu0 0.0
  %655 = vmatpush1.msra.mxu0 %v638
  %656 = vmatprep.subr.mxu0 0.0
  %657 = vmatpush1.msra.mxu0 0.0
  %658 = vmatprep.subr.mxu0 0.0
  %659 = vmatpush1.msra.mxu0 0.0
  %660 = vmatprep.subr.mxu0 0.0
  %661 = vmatpush1.msra.mxu0 0.0
  %662 = vmatprep.subr.mxu0 0.0
  %663 = vmatpush1.msra.mxu0 0.0
  %664 = vmatprep.subr.mxu0 0.0
  %665 = vmatpush1.msra.mxu0 0.0
  %666 = vmatprep.subr.mxu0 0.0
  %667 = vmatpush1.msra.mxu0 0.0
  %668 = vmatprep.subr.mxu0 0.0
  %669 = vmatpush1.msra.mxu0 0.0
  %670 = vmatprep.subr.mxu0 0.0
  %671 = vmatpush1.msra.mxu0 0.0
  %672 = vmatprep.subr.mxu0 0.0
  %673 = vmatpush1.msra.mxu0 0.0
  %674 = vmatprep.subr.mxu0 0.0
  %675 = vmatpush1.msra.mxu0 0.0
  %676 = vmatprep.subr.mxu0 0.0
  %677 = vmatpush1.msra.mxu0 0.0
  %678 = vmatprep.subr.mxu0 0.0
  %679 = vmatpush1.msra.mxu0 0.0
  %680 = vmatprep.subr.mxu0 0.0
  %681 = vmatpush1.msra.mxu0 0.0
  %682 = vmatprep.subr.mxu0 0.0
  %683 = vmatpush1.msra.mxu0 0.0
  %684 = vmatprep.subr.mxu0 0.0
  %685 = vmatpush1.msra.mxu0 0.0
  %686 = vmatprep.subr.mxu0 0.0
  %687 = vmatpush1.msra.mxu0 0.0
  %688 = vmatprep.subr.mxu0 0.0
  %689 = vmatpush1.msra.mxu0 0.0
  %690 = vmatprep.subr.mxu0 0.0
  %691 = vmatpush1.msra.mxu0 0.0
  %692 = vmatprep.subr.mxu0 0.0
  %693 = vmatpush1.msra.mxu0 0.0
  %694 = vmatprep.subr.mxu0 0.0
  %695 = vmatpush1.msra.mxu0 0.0
  %696 = vmatprep.subr.mxu0 0.0
  %697 = vmatpush1.msra.mxu0 0.0
  %698 = vmatprep.subr.mxu0 0.0
  %699 = vmatpush1.msra.mxu0 0.0
  %700 = vmatprep.subr.mxu0 0.0
  %701 = vmatpush1.msra.mxu0 0.0
  %702 = vmatprep.subr.mxu0 0.0
  %703 = vmatpush1.msra.mxu0 0.0
  %704 = vmatprep.subr.mxu0 0.0
  %705 = vmatpush1.msra.mxu0 0.0
  %706 = vmatprep.subr.mxu0 0.0
  %707 = vmatpush1.msra.mxu0 0.0
  %708 = vmatprep.subr.mxu0 0.0
  %709 = vmatpush1.msra.mxu0 0.0
  %710 = vmatprep.subr.mxu0 0.0
  %711 = vmatpush1.msra.mxu0 0.0
  %712 = vmatprep.subr.mxu0 0.0
  %713 = vmatpush1.msra.mxu0 0.0
  %714 = vmatprep.subr.mxu0 0.0
  %715 = vmatpush1.msra.mxu0 0.0
  %716 = vmatprep.mubr.f32.mxu0 0.0
  %717 = vmatmul.mubr.f32.gmra.mrb[0].mxu0 %v641
  %v718 = vpop.f32.mrb[0].mxu0
  %v719 = vadd.f32 0.0, %v718
  %v720 = vpop.f32.mrb[0].mxu0
  %721 = vmatprep.mubr.f32.mxu0 0.0
  %722 = vmatmul.mubr.f32.gmra.mrb[0].mxu0 %v644
  %v723 = vpop.f32.mrb[0].mxu0
  %v724 = vadd.f32 0.0, %v723
  %v725 = vpop.f32.mrb[0].mxu0
  %726 = vmatprep.mubr.f32.mxu0 0.0
  %727 = vmatmul.mubr.f32.gmra.mrb[0].mxu0 %v647
  %v728 = vpop.f32.mrb[0].mxu0
  %v729 = vadd.f32 0.0, %v728
  %v730 = vpop.f32.mrb[0].mxu0
  %731 = vmatprep.mubr.f32.mxu0 0.0
  %732 = vmatmul.mubr.f32.gmra.mrb[0].mxu0 %v650
  %v733 = vpop.f32.mrb[0].mxu0
  %v734 = vadd.f32 0.0, %v733
  %v735 = vpop.f32.mrb[0].mxu0
  %736 = vdwg.mxu0
  %v738 = vsel %vm639, %v624, 0
  %v741 = vsel %vm639, %v626, 0
  %v744 = vsel %vm639, %v628, 0
  %v747 = vsel %vm639, %v630, 0
  %749 = vmatprep.subr.mxu0 0.0
  %750 = vmatpush1.msra.mxu0 %v631
  %751 = vmatprep.subr.mxu0 0.0
  %752 = vmatpush1.msra.mxu0 %v632
  %753 = vmatprep.subr.mxu0 0.0
  %754 = vmatpush1.msra.mxu0 0.0
  %755 = vmatprep.subr.mxu0 0.0
  %756 = vmatpush1.msra.mxu0 0.0
  %757 = vmatprep.subr.mxu0 0.0
  %758 = vmatpush1.msra.mxu0 0.0
  %759 = vmatprep.subr.mxu0 0.0
  %760 = vmatpush1.msra.mxu0 0.0
  %761 = vmatprep.subr.mxu0 0.0
  %762 = vmatpush1.msra.mxu0 0.0
  %763 = vmatprep.subr.mxu0 0.0
  %764 = vmatpush1.msra.mxu0 0.0
  %765 = vmatprep.subr.mxu0 0.0
  %766 = vmatpush1.msra.mxu0 0.0
  %767 = vmatprep.subr.mxu0 0.0
  %768 = vmatpush1.msra.mxu0 0.0
  %769 = vmatprep.subr.mxu0 0.0
  %770 = vmatpush1.msra.mxu0 0.0
  %771 = vmatprep.subr.mxu0 0.0
  %772 = vmatpush1.msra.mxu0 0.0
  %773 = vmatprep.subr.mxu0 0.0
  %774 = vmatpush1.msra.mxu0 0.0
  %775 = vmatprep.subr.mxu0 0.0
  %776 = vmatpush1.msra.mxu0 0.0
  %777 = vmatprep.subr.mxu0 0.0
  %778 = vmatpush1.msra.mxu0 0.0
  %779 = vmatprep.subr.mxu0 0.0
  %780 = vmatpush1.msra.mxu0 0.0
  %781 = vmatprep.subr.mxu0 0.0
  %782 = vmatpush1.msra.mxu0 0.0
  %783 = vmatprep.subr.mxu0 0.0
  %784 = vmatpush1.msra.mxu0 0.0
  %785 = vmatprep.subr.mxu0 0.0
  %786 = vmatpush1.msra.mxu0 0.0
  %787 = vmatprep.subr.mxu0 0.0
  %788 = vmatpush1.msra.mxu0 0.0
  %789 = vmatprep.subr.mxu0 0.0
  %790 = vmatpush1.msra.mxu0 0.0
  %791 = vmatprep.subr.mxu0 0.0
  %792 = vmatpush1.msra.mxu0 0.0
  %793 = vmatprep.subr.mxu0 0.0
  %794 = vmatpush1.msra.mxu0 0.0
  %795 = vmatprep.subr.mxu0 0.0
  %796 = vmatpush1.msra.mxu0 0.0
  %797 = vmatprep.subr.mxu0 0.0
  %798 = vmatpush1.msra.mxu0 0.0
  %799 = vmatprep.subr.mxu0 0.0
  %800 = vmatpush1.msra.mxu0 0.0
  %801 = vmatprep.subr.mxu0 0.0
  %802 = vmatpush1.msra.mxu0 0.0
  %803 = vmatprep.subr.mxu0 0.0
  %804 = vmatpush1.msra.mxu0 0.0
  %805 = vmatprep.subr.mxu0 0.0
  %806 = vmatpush1.msra.mxu0 0.0
  %807 = vmatprep.subr.mxu0 0.0
  %808 = vmatpush1.msra.mxu0 0.0
  %809 = vmatprep.subr.mxu0 0.0
  %810 = vmatpush1.msra.mxu0 0.0
  %811 = vmatprep.subr.mxu0 0.0
  %812 = vmatpush1.msra.mxu0 0.0
  %813 = vmatprep.mubr.f32.mxu0 0.0
  %814 = vmatmul.mubr.f32.gmra.mrb[0].mxu0 %v738
  %v815 = vpop.f32.mrb[0].mxu0
  %v816 = vadd.f32 %v719, %v815
  %v817 = vpop.f32.mrb[0].mxu0
  %818 = vmatprep.mubr.f32.mxu0 0.0
  %819 = vmatmul.mubr.f32.gmra.mrb[0].mxu0 %v741
  %v820 = vpop.f32.mrb[0].mxu0
  %v821 = vadd.f32 %v724, %v820
  %v822 = vpop.f32.mrb[0].mxu0
  %823 = vmatprep.mubr.f32.mxu0 0.0
  %824 = vmatmul.mubr.f32.gmra.mrb[0].mxu0 %v744
  %v825 = vpop.f32.mrb[0].mxu0
  %v826 = vadd.f32 %v729, %v825
  %v827 = vpop.f32.mrb[0].mxu0
  %828 = vmatprep.mubr.f32.mxu0 0.0
  %829 = vmatmul.mubr.f32.gmra.mrb[0].mxu0 %v747
  %v830 = vpop.f32.mrb[0].mxu0
  %v831 = vadd.f32 %v734, %v830
  %v832 = vpop.f32.mrb[0].mxu0
  %833 = vdwg.mxu0
  %v834 = vld [vmem:[%s9] sm:$0x1]
  %v836 = vlaneseq
  %v837 = vshrl.u32 %v836, 7
  %v838 = vsub.s32 0, %v837
  %v839 = vrot.slane %v834, %v838
  %v841 = vadd.f32 %v816, %v839
  %v842 = vadd.f32 %v821, %v839
  %v843 = vadd.f32 %v826, %v839
  %v844 = vadd.f32 %v831, %v839
  %v845 = vmax.f32 %v841, 0.0
  %v846 = vmax.f32 %v842, 0.0
  %v847 = vmax.f32 %v843, 0.0
  %v848 = vmax.f32 %v844, 0.0
  %v849 = vld [vmem:[%s10] sm:$0xff]
  %v850 = vld [vmem:[%s10 + $0x8] sm:$0xff]
  %v851 = vld [vmem:[%s10 + $0x10] sm:$0xff]
  %v852 = vld [vmem:[%s10 + $0x18] sm:$0xff]
  %v853 = vld [vmem:[%s11] sm:$0x1]
  %v855 = vlaneseq
  %v856 = vshrl.u32 %v855, 7
  %v857 = vsub.s32 0, %v856
  %v858 = vrot.slane %v853, %v857
  %vm860 = vcmask 261120
  %v862 = vsel %vm860, %v845, 0
  %v865 = vsel %vm860, %v846, 0
  %v868 = vsel %vm860, %v847, 0
  %v871 = vsel %vm860, %v848, 0
  %873 = vmatprep.subr.mxu0 0.0
  %874 = vmatpush1.msra.mxu0 %v849
  %875 = vmatprep.subr.mxu0 0.0
  %876 = vmatpush1.msra.mxu0 %v850
  %877 = vmatprep.subr.mxu0 0.0
  %878 = vmatpush1.msra.mxu0 %v851
  %879 = vmatprep.subr.mxu0 0.0
  %880 = vmatpush1.msra.mxu0 %v852
  %881 = vmatprep.subr.mxu0 0.0
  %882 = vmatpush1.msra.mxu0 0.0
  %883 = vmatprep.subr.mxu0 0.0
  %884 = vmatpush1.msra.mxu0 0.0
  %885 = vmatprep.subr.mxu0 0.0
  %886 = vmatpush1.msra.mxu0 0.0
  %887 = vmatprep.subr.mxu0 0.0
  %888 = vmatpush1.msra.mxu0 0.0
  %889 = vmatprep.subr.mxu0 0.0
  %890 = vmatpush1.msra.mxu0 0.0
  %891 = vmatprep.subr.mxu0 0.0
  %892 = vmatpush1.msra.mxu0 0.0
  %893 = vmatprep.subr.mxu0 0.0
  %894 = vmatpush1.msra.mxu0 0.0
  %895 = vmatprep.subr.mxu0 0.0
  %896 = vmatpush1.msra.mxu0 0.0
  %897 = vmatprep.subr.mxu0 0.0
  %898 = vmatpush1.msra.mxu0 0.0
  %899 = vmatprep.subr.mxu0 0.0
  %900 = vmatpush1.msra.mxu0 0.0
  %901 = vmatprep.subr.mxu0 0.0
  %902 = vmatpush1.msra.mxu0 0.0
  %903 = vmatprep.subr.mxu0 0.0
  %904 = vmatpush1.msra.mxu0 0.0
  %905 = vmatprep.subr.mxu0 0.0
  %906 = vmatpush1.msra.mxu0 0.0
  %907 = vmatprep.subr.mxu0 0.0
  %908 = vmatpush1.msra.mxu0 0.0
  %909 = vmatprep.subr.mxu0 0.0
  %910 = vmatpush1.msra.mxu0 0.0
  %911 = vmatprep.subr.mxu0 0.0
  %912 = vmatpush1.msra.mxu0 0.0
  %913 = vmatprep.subr.mxu0 0.0
  %914 = vmatpush1.msra.mxu0 0.0
  %915 = vmatprep.subr.mxu0 0.0
  %916 = vmatpush1.msra.mxu0 0.0
  %917 = vmatprep.subr.mxu0 0.0
  %918 = vmatpush1.msra.mxu0 0.0
  %919 = vmatprep.subr.mxu0 0.0
  %920 = vmatpush1.msra.mxu0 0.0
  %921 = vmatprep.subr.mxu0 0.0
  %922 = vmatpush1.msra.mxu0 0.0
  %923 = vmatprep.subr.mxu0 0.0
  %924 = vmatpush1.msra.mxu0 0.0
  %925 = vmatprep.subr.mxu0 0.0
  %926 = vmatpush1.msra.mxu0 0.0
  %927 = vmatprep.subr.mxu0 0.0
  %928 = vmatpush1.msra.mxu0 0.0
  %929 = vmatprep.subr.mxu0 0.0
  %930 = vmatpush1.msra.mxu0 0.0
  %931 = vmatprep.subr.mxu0 0.0
  %932 = vmatpush1.msra.mxu0 0.0
  %933 = vmatprep.subr.mxu0 0.0
  %934 = vmatpush1.msra.mxu0 0.0
  %935 = vmatprep.subr.mxu0 0.0
  %936 = vmatpush1.msra.mxu0 0.0
  %937 = vmatprep.mubr.f32.mxu0 0.0
  %938 = vmatmul.mubr.f32.gmra.mrb[0].mxu0 %v862
  %v939 = vpop.f32.mrb[0].mxu0
  %v940 = vadd.f32 %v858, %v939
  %v941 = vpop.f32.mrb[0].mxu0
  %942 = vmatprep.mubr.f32.mxu0 0.0
  %943 = vmatmul.mubr.f32.gmra.mrb[0].mxu0 %v865
  %v944 = vpop.f32.mrb[0].mxu0
  %v945 = vadd.f32 %v858, %v944
  %v946 = vpop.f32.mrb[0].mxu0
  %947 = vmatprep.mubr.f32.mxu0 0.0
  %948 = vmatmul.mubr.f32.gmra.mrb[0].mxu0 %v868
  %v949 = vpop.f32.mrb[0].mxu0
  %v950 = vadd.f32 %v858, %v949
  %v951 = vpop.f32.mrb[0].mxu0
  %952 = vmatprep.mubr.f32.mxu0 0.0
  %953 = vmatmul.mubr.f32.gmra.mrb[0].mxu0 %v871
  %v954 = vpop.f32.mrb[0].mxu0
  %v955 = vadd.f32 %v858, %v954
  %v956 = vpop.f32.mrb[0].mxu0
  %957 = vdwg.mxu0
  %958 = vst.msk [vmem:[%s12] sm:$0xff] %vm639, %v940
  %959 = vst.msk [vmem:[%s12 + $0x8] sm:$0xff] %vm639, %v945
  %960 = vst.msk [vmem:[%s12 + $0x10] sm:$0xff] %vm639, %v950
  %961 = vst.msk [vmem:[%s12 + $0x18] sm:$0xff] %vm639, %v955
  // Predicated region
  $region50: #{tpu_custom_call.1} parent=0 // pred_check
    _
  $region51: #{tpu_custom_call.1} parent=0 // pred_check_branch
    %963 = sbr.rel (0) target = $region53
  $region52: #{tpu_custom_call.1} parent=0 // pred_region
    _
  $region53: #{tpu_custom_call.1} parent=0 // pred_fallthru
    _
  // Predicated region
  $region54: #{tpu_custom_call.1} parent=0 // pred_check
    _
  $region55: #{tpu_custom_call.1} parent=0 // pred_check_branch
    %965 = sbr.rel (0) target = $region57
  $region56: #{tpu_custom_call.1} parent=0 // pred_region
    _
  $region57: #{tpu_custom_call.1} parent=0 // pred_fallthru
    _

</llo_original>
